<compile_context>
chip_gen: v7x
topology: tpu7x:2x2x1
jax: 0.10.0
libtpu: 0.0.40
codegen_flags: <defaults>
</compile_context>

<pallas_src>
import functools

import jax
import jax.numpy as jnp
from jax.experimental import pallas as pl
from jax.experimental.pallas import tpu as pltpu

TEMP = 0.1
EPS = 1e-12                 # F.normalize eps
_EPS2 = EPS * EPS
_CONTRACT_LAST = (((1,), (1,)), ((), ()))   # A(m,k) x B(n,k) -> (m,n), no .T copy


def _gsc_kernel(z_rows_ref, z_all_ref, x_rows_ref, x_all_ref, loss_ref, *, temp):
    """One row-tile of the per-sample GSC loss.  Output block: (tB, 1) float32."""
    inv_temp = 1.0 / temp

    x_rows = x_rows_ref[...].astype(jnp.float32)      # (tB, F)
    x_all = x_all_ref[...].astype(jnp.float32)        # (B, F)
    z_rows = z_rows_ref[...].astype(jnp.float32)      # (tB, Dz)

    # F.normalize(x, dim=-1): x / max(||x||, eps)  ->  inv = rsqrt(max(x_sq, eps^2))
    xr_sq = jnp.sum(x_rows * x_rows, axis=-1, keepdims=True)           # (tB, 1)
    xa_sq = jnp.sum(x_all * x_all, axis=-1, keepdims=True)             # (B, 1)
    inv_r = jax.lax.rsqrt(jnp.maximum(xr_sq, _EPS2))                   # (tB, 1)
    inv_a = jax.lax.rsqrt(jnp.maximum(xa_sq, _EPS2))                   # (B, 1)

    # bf16 MXU operands, f32 accumulation.  Column-side normalization goes on the
    # operand (natural column broadcast); row-side is folded onto the small Gram.
    x_rows_b = x_rows_ref[...].astype(jnp.bfloat16)                    # (tB, F)
    x_nall_b = (x_all * inv_a).astype(jnp.bfloat16)                    # (B, F)
    z_rows_b = z_rows_ref[...].astype(jnp.bfloat16)                    # (tB, Dz)
    z_all_b = z_all_ref[...].astype(jnp.bfloat16)                      # (B, Dz)

    gx = jax.lax.dot_general(x_rows_b, x_nall_b, _CONTRACT_LAST,
                             preferred_element_type=jnp.float32)       # (tB, B)
    gz = jax.lax.dot_general(z_rows_b, z_all_b, _CONTRACT_LAST,
                             preferred_element_type=jnp.float32)       # (tB, B)

    # d_ij = (x_gram_ij - z_gram_ij) / temp ; x_gram = gx scaled by inv_r on rows.
    d = (gx * inv_r - gz) * inv_temp                                   # (tB, B)

    # Analytic diagonal removal (replaces the iota/where off-diagonal mask):
    #   d_ii = (||x_n_i||^2 - ||z_i||^2) / temp
    z_sq = jnp.sum(z_rows * z_rows, axis=-1, keepdims=True)            # (tB, 1)
    x_diag = xr_sq * (inv_r * inv_r)                                   # ||x_n_i||^2 (≈ 1)
    d_diag = (x_diag - z_sq) * inv_temp                                # (tB, 1)

    loss_ref[...] = jnp.sum(d * d, axis=-1, keepdims=True) - d_diag * d_diag


def _pick_row_tile(batch):
    for t in (512, 256, 128):
        if batch % t == 0:
            return t
    return batch


def gsc_forward(z, x, temp=TEMP, reduction='none'):
    """Pallas implementation of GSC(temp).forward(z, x) -> per-sample loss (B,)."""
    assert z.ndim == 2 and x.ndim == 2 and z.shape[0] == x.shape[0]
    B, Dz = z.shape
    _, Fx = x.shape
    tB = _pick_row_tile(B)
    num_tiles = B // tB

    # Scoped-VMEM budget sized to the real footprint (double-buffered f32 inputs,
    # bf16 copies, (tB,B) Gram temporaries), clamped to [32 MiB, 64 MiB] so it is
    # safe on v7x (64 MiB physical) while above every generation's default.
    in_bytes = 4 * (tB * Dz + B * Dz + tB * Fx + B * Fx)
    tmp_bytes = 4 * 8 * tB * B + 4 * tB
    vmem_limit = int(min(max(3 * in_bytes + tmp_bytes + (2 << 20),
                             32 * 1024 * 1024), 64 * 1024 * 1024))

    cost = pl.CostEstimate(
        flops=2 * B * B * (Fx + Dz) + 6 * B * B,
        transcendentals=2 * B,
        bytes_accessed=4 * ((num_tiles + 1) * B * (Fx + Dz) + B),
    )

    kernel = functools.partial(_gsc_kernel, temp=temp)
    out = pl.pallas_call(
        kernel,
        out_shape=jax.ShapeDtypeStruct((B, 1), jnp.float32),
        grid=(num_tiles,),
        in_specs=[
            pl.BlockSpec((tB, Dz), lambda i: (i, 0)),   # z row tile
            pl.BlockSpec((B, Dz), lambda i: (0, 0)),    # z, all rows (columns side)
            pl.BlockSpec((tB, Fx), lambda i: (i, 0)),   # x row tile
            pl.BlockSpec((B, Fx), lambda i: (0, 0)),    # x, all rows (columns side)
        ],
        out_specs=pl.BlockSpec((tB, 1), lambda i: (i, 0)),
        compiler_params=pltpu.CompilerParams(
            dimension_semantics=("parallel",),
            vmem_limit_bytes=vmem_limit,
        ),
        cost_estimate=cost,
    )(z, z, x, x)

    per_sample = out[:, 0]                              # (B,)
    if reduction == 'mean':
        return jnp.mean(per_sample)
    if reduction == 'sum':
        return jnp.sum(per_sample)
    return per_sample                                   # 'none' (module default)


# ---------------- pure-JAX reference (mirrors the PyTorch code) ----------------
def gsc_reference(z, x, temp=TEMP):
    x_n = x / jnp.maximum(jnp.linalg.norm(x, axis=-1, keepdims=True), EPS)
    B = x.shape[0]
    ori = jnp.exp(jnp.matmul(x_n, x_n.T / temp))        # (B, B)
    anc = jnp.exp(jnp.matmul(z, z.T / temp))            # (B, B)
    sq = (jnp.log(ori) - jnp.log(anc)) ** 2
    eye_b = jnp.eye(B, dtype=bool)
    # masked_select of off-diagonals + view(B, B-1) + sum(1) == per-row off-diag sum
    return jnp.sum(jnp.where(eye_b, 0.0, sq), axis=1)   # (B,)


if __name__ == "__main__":
    key = jax.random.PRNGKey(0)
    kz, kx = jax.random.split(key)
    B, Dz, Fx = 8, 32, 32                 # batch, z dim, x feature dim
    # In PCLAD, GSC receives an already-normalized z_anchor; normalizing here also
    # keeps the exp/log reference path finite for the comparison.
    z_raw = jax.random.normal(kz, (B, Dz), dtype=jnp.float32)
    z = z_raw / jnp.linalg.norm(z_raw, axis=-1, keepdims=True)
    x = jax.random.normal(kx, (B, Fx), dtype=jnp.float32)

    out = gsc_forward(z, x)               # (B,) per-sample GSC loss ('none' reduction)
    jax.block_until_ready(out)

    ref = gsc_reference(z, x)
    assert out.shape == (B,), out.shape
    assert jnp.allclose(out, ref, rtol=2e-2, atol=2e-2), (out, ref)

    print("KERNEL_OK")
</pallas_src>

<mosaic_0001>
module attributes {stable_mosaic.version = 11 : i64} {
  func.func @_gsc_kernel(%arg0: i32, %arg1: memref<8x32xf32, #tpu.memory_space<vmem>>, %arg2: memref<8x32xf32, #tpu.memory_space<vmem>>, %arg3: memref<8x32xf32, #tpu.memory_space<vmem>>, %arg4: memref<8x32xf32, #tpu.memory_space<vmem>>, %arg5: memref<8x1xf32, #tpu.memory_space<vmem>>) attributes {dimension_semantics = [#tpu.dimension_semantics<parallel>], iteration_bounds = array<i64: 1>, scalar_prefetch = 0 : i64, scratch_operands = 0 : i64, tpu.core_type = #tpu.core_type<tc>, window_params = [{transform_indices = @transform_0, window_bounds = array<i64: 8, 32>}, {pipeline_mode = #tpu.pipeline_mode<synchronous>, transform_indices = @transform_1, window_bounds = array<i64: 8, 32>}, {transform_indices = @transform_2, window_bounds = array<i64: 8, 32>}, {pipeline_mode = #tpu.pipeline_mode<synchronous>, transform_indices = @transform_3, window_bounds = array<i64: 8, 32>}, {transform_indices = @transform_4, window_bounds = array<i64: 8, 1>}]} {
    %c0 = arith.constant 0 : index
    %c0_0 = arith.constant 0 : index
    %0 = vector.load %arg3[%c0, %c0_0] : memref<8x32xf32, #tpu.memory_space<vmem>>, vector<8x32xf32>
    %c0_1 = arith.constant 0 : index
    %c0_2 = arith.constant 0 : index
    %1 = vector.load %arg4[%c0_1, %c0_2] : memref<8x32xf32, #tpu.memory_space<vmem>>, vector<8x32xf32>
    %c0_3 = arith.constant 0 : index
    %c0_4 = arith.constant 0 : index
    %2 = vector.load %arg1[%c0_3, %c0_4] : memref<8x32xf32, #tpu.memory_space<vmem>>, vector<8x32xf32>
    %3 = arith.mulf %0, %0 : vector<8x32xf32>
    %cst = arith.constant dense<0.000000e+00> : vector<8xf32>
    %4 = vector.multi_reduction <add>, %3, %cst [1] : vector<8x32xf32> to vector<8xf32>
    %5 = vector.shape_cast %4 : vector<8xf32> to vector<8x1xf32>
    %6 = arith.mulf %1, %1 : vector<8x32xf32>
    %cst_5 = arith.constant dense<0.000000e+00> : vector<8xf32>
    %7 = vector.multi_reduction <add>, %6, %cst_5 [1] : vector<8x32xf32> to vector<8xf32>
    %8 = vector.shape_cast %7 : vector<8xf32> to vector<8x1xf32>
    %cst_6 = arith.constant 1.000000e-24 : f32
    %9 = vector.broadcast %cst_6 : f32 to vector<8x1xf32>
    %10 = arith.maximumf %5, %9 : vector<8x1xf32>
    %11 = math.rsqrt %10 : vector<8x1xf32>
    %cst_7 = arith.constant 1.000000e-24 : f32
    %12 = vector.broadcast %cst_7 : f32 to vector<8x1xf32>
    %13 = arith.maximumf %8, %12 : vector<8x1xf32>
    %14 = math.rsqrt %13 : vector<8x1xf32>
    %c0_8 = arith.constant 0 : index
    %c0_9 = arith.constant 0 : index
    %15 = vector.load %arg3[%c0_8, %c0_9] : memref<8x32xf32, #tpu.memory_space<vmem>>, vector<8x32xf32>
    %16 = arith.truncf %15 : vector<8x32xf32> to vector<8x32xbf16>
    %17 = vector.broadcast %14 : vector<8x1xf32> to vector<8x32xf32>
    %18 = arith.mulf %1, %17 : vector<8x32xf32>
    %19 = arith.truncf %18 : vector<8x32xf32> to vector<8x32xbf16>
    %c0_10 = arith.constant 0 : index
    %c0_11 = arith.constant 0 : index
    %20 = vector.load %arg1[%c0_10, %c0_11] : memref<8x32xf32, #tpu.memory_space<vmem>>, vector<8x32xf32>
    %21 = arith.truncf %20 : vector<8x32xf32> to vector<8x32xbf16>
    %c0_12 = arith.constant 0 : index
    %c0_13 = arith.constant 0 : index
    %22 = vector.load %arg2[%c0_12, %c0_13] : memref<8x32xf32, #tpu.memory_space<vmem>>, vector<8x32xf32>
    %23 = arith.truncf %22 : vector<8x32xf32> to vector<8x32xbf16>
    %cst_14 = arith.constant dense<0.000000e+00> : vector<8x8xf32>
    %24 = tpu.matmul %16, %19, %cst_14 {dimension_numbers = #tpu.dot_dimension_numbers<[1], [1], [0], [0], [0, 0, 1, 0], [], []>} : vector<8x32xbf16>, vector<8x32xbf16>, vector<8x8xf32> -> vector<8x8xf32>
    %cst_15 = arith.constant dense<0.000000e+00> : vector<8x8xf32>
    %25 = tpu.matmul %21, %23, %cst_15 {dimension_numbers = #tpu.dot_dimension_numbers<[1], [1], [0], [0], [0, 0, 1, 0], [], []>} : vector<8x32xbf16>, vector<8x32xbf16>, vector<8x8xf32> -> vector<8x8xf32>
    %26 = vector.broadcast %11 : vector<8x1xf32> to vector<8x8xf32>
    %27 = arith.mulf %24, %26 : vector<8x8xf32>
    %28 = arith.subf %27, %25 : vector<8x8xf32>
    %cst_16 = arith.constant 1.000000e+01 : f32
    %29 = vector.broadcast %cst_16 : f32 to vector<8x8xf32>
    %30 = arith.mulf %28, %29 : vector<8x8xf32>
    %31 = arith.mulf %2, %2 : vector<8x32xf32>
    %cst_17 = arith.constant dense<0.000000e+00> : vector<8xf32>
    %32 = vector.multi_reduction <add>, %31, %cst_17 [1] : vector<8x32xf32> to vector<8xf32>
    %33 = vector.shape_cast %32 : vector<8xf32> to vector<8x1xf32>
    %34 = arith.mulf %11, %11 : vector<8x1xf32>
    %35 = arith.mulf %5, %34 : vector<8x1xf32>
    %36 = arith.subf %35, %33 : vector<8x1xf32>
    %cst_18 = arith.constant 1.000000e+01 : f32
    %37 = vector.broadcast %cst_18 : f32 to vector<8x1xf32>
    %38 = arith.mulf %36, %37 : vector<8x1xf32>
    %39 = arith.mulf %30, %30 : vector<8x8xf32>
    %cst_19 = arith.constant dense<0.000000e+00> : vector<8xf32>
    %40 = vector.multi_reduction <add>, %39, %cst_19 [1] : vector<8x8xf32> to vector<8xf32>
    %41 = vector.shape_cast %40 : vector<8xf32> to vector<8x1xf32>
    %42 = arith.mulf %38, %38 : vector<8x1xf32>
    %43 = arith.subf %41, %42 : vector<8x1xf32>
    %c0_20 = arith.constant 0 : index
    %c0_21 = arith.constant 0 : index
    %44 = vector.load %arg5[%c0_20, %c0_21] : memref<8x1xf32, #tpu.memory_space<vmem>>, vector<8x1xf32>
    tpu.vector_store %arg5[%c0_20, %c0_21], %43 {strides = array<i32>} : memref<8x1xf32, #tpu.memory_space<vmem>>, vector<8x1xf32>,
    return
  }
  func.func @transform_0(%arg0: i32) -> (i32, i32) {
    %c0_i32 = arith.constant 0 : i32
    %c0_i32_0 = arith.constant 0 : i32
    return %arg0, %c0_i32 : i32, i32
  }
  func.func @transform_1(%arg0: i32) -> (i32, i32) {
    %c0_i32 = arith.constant 0 : i32
    %c0_i32_0 = arith.constant 0 : i32
    %c0_i32_1 = arith.constant 0 : i32
    return %c0_i32, %c0_i32_0 : i32, i32
  }
  func.func @transform_2(%arg0: i32) -> (i32, i32) {
    %c0_i32 = arith.constant 0 : i32
    %c0_i32_0 = arith.constant 0 : i32
    return %arg0, %c0_i32 : i32, i32
  }
  func.func @transform_3(%arg0: i32) -> (i32, i32) {
    %c0_i32 = arith.constant 0 : i32
    %c0_i32_0 = arith.constant 0 : i32
    %c0_i32_1 = arith.constant 0 : i32
    return %c0_i32, %c0_i32_0 : i32, i32
  }
  func.func @transform_4(%arg0: i32) -> (i32, i32) {
    %c0_i32 = arith.constant 0 : i32
    %c0_i32_0 = arith.constant 0 : i32
    return %arg0, %c0_i32 : i32, i32
  }
}

</mosaic_0001>

<llo_original>
// kernel: tpu_custom_call.1
$region0: #{tpu_custom_call.1}
  #allocation0 [shape = 'u32[]', space=smem, size = 0x4, offset = 0x4, fixed_abs, tag = 'smem constant byte address 0x4 - core index']
  #allocation1 [shape = 'u32[144,128]{1,0:T(1,128)}', space=vmem, size = 0x12000, scoped, tag = 'internal scratch']
  %s0 = inlined_call_operand.hbm [shape: f32[8,32], index: 0, kind: input, shape index: {}]
  %s1 = inlined_call_operand.hbm [shape: f32[8,32], index: 1, kind: input, shape index: {}]
  %s2 = inlined_call_operand.hbm [shape: f32[8,32], index: 2, kind: input, shape index: {}]
  %s3 = inlined_call_operand.vmem [shape: f32[8,32], index: 3, kind: input, shape index: {}]
  %s4 = inlined_call_operand.vmem [shape: f32[8,1], index: 4, kind: output, shape index: {}]
  %s5 = sld [smem:[#allocation0]]
  $region38: #{tpu_custom_call.1} parent=0
    _
  %s7 = ssub.s32 1, %s5
  %s8 = scalar_select 0, %s7, %s5
  $region1: #{tpu_custom_call.1} parent=0
    #allocation2 [shape = 'u8[4096]{0}', space=vmem, size = 0x1000, scoped, tag = 'input window, operand 0, single buffered']
    #allocation3 [shape = 's32[1]{0}', space=sflag, size = 0x4, scoped, tag = 'scoped memory for tpu_custom_call.1']
    #allocation4 [shape = 'u8[4096]{0}', space=vmem, size = 0x1000, scoped, tag = 'input window, operand 1, single buffered']
    #allocation5 [shape = 's32[1]{0}', space=sflag, size = 0x4, scoped, tag = 'scoped memory for tpu_custom_call.1']
    #allocation6 [shape = 'u8[4096]{0}', space=vmem, size = 0x1000, scoped, tag = 'input window, operand 2, single buffered']
    %9 = vsyncpa [#allocation3], 0
    %10 = vsyncpa [#allocation5], 0
    // Predicated region
    $region2: #{tpu_custom_call.1} parent=1 // pred_check
      _
    $region3: #{tpu_custom_call.1} parent=1 // pred_check_branch
      %12 = sbr.rel (0) target = $region5
    $region4: #{tpu_custom_call.1} parent=1 // pred_region
      %s14 = ssub.s32 128, 128
      %15 = vsyncadd [#allocation3], %s14
      %s17 = sshll.u32 [#allocation2], 4
      %s18 = int_to_ptr.vmem [resolvable:$true] %s17
      %20 = dma.hbm_to_vmem [thread:$0]  %s0, 128, %s18, [#allocation3]
    $region5: #{tpu_custom_call.1} parent=1 // pred_fallthru
      _
    // Predicated region
    $region6: #{tpu_custom_call.1} parent=1 // pred_check
      _
    $region7: #{tpu_custom_call.1} parent=1 // pred_check_branch
      %22 = sbr.rel (0) target = $region9
    $region8: #{tpu_custom_call.1} parent=1 // pred_region
      %s24 = ssub.s32 128, 128
      %25 = vsyncadd [#allocation5], %s24
      %s27 = sshll.u32 [#allocation4], 4
      %s28 = int_to_ptr.vmem [resolvable:$true] %s27
      %30 = dma.hbm_to_vmem [thread:$0]  %s1, 128, %s28, [#allocation5]
    $region9: #{tpu_custom_call.1} parent=1 // pred_fallthru
      _
    // Predicated region
    $region10: #{tpu_custom_call.1} parent=1 // pred_check
      _
    $region11: #{tpu_custom_call.1} parent=1 // pred_check_branch
      %32 = sbr.rel (0) target = $region13
    $region12: #{tpu_custom_call.1} parent=1 // pred_region
      %s34 = ssub.s32 128, 128
      %35 = vsyncadd [#allocation5], %s34
      %s37 = sshll.u32 [#allocation6], 4
      %s38 = int_to_ptr.vmem [resolvable:$true] %s37
      %40 = dma.hbm_to_vmem [thread:$0]  %s2, 128, %s38, [#allocation5]
    $region13: #{tpu_custom_call.1} parent=1 // pred_fallthru
      _
    // Predicated region
    $region14: #{tpu_custom_call.1} parent=1 // pred_check
      _
    $region15: #{tpu_custom_call.1} parent=1 // pred_check_branch
      %42 = sbr.rel (0) target = $region17
    $region16: #{tpu_custom_call.1} parent=1 // pred_region
      _
    $region17: #{tpu_custom_call.1} parent=1 // pred_fallthru
      _
    // Predicated region
    $region18: #{tpu_custom_call.1} parent=1 // pred_check
      _
    $region19: #{tpu_custom_call.1} parent=1 // pred_check_branch
      %44 = sbr.rel (0) target = $region21
    $region20: #{tpu_custom_call.1} parent=1 // pred_region
      %45 = dma.done [#allocation3], 128
    $region21: #{tpu_custom_call.1} parent=1 // pred_fallthru
      _
    // Predicated region
    $region22: #{tpu_custom_call.1} parent=1 // pred_check
      _
    $region23: #{tpu_custom_call.1} parent=1 // pred_check_branch
      %47 = sbr.rel (0) target = $region25
    $region24: #{tpu_custom_call.1} parent=1 // pred_region
      %48 = dma.done [#allocation5], 128
    $region25: #{tpu_custom_call.1} parent=1 // pred_fallthru
      _
    // Predicated region
    $region26: #{tpu_custom_call.1} parent=1 // pred_check
      _
    $region27: #{tpu_custom_call.1} parent=1 // pred_check_branch
      %50 = sbr.rel (0) target = $region29
    $region28: #{tpu_custom_call.1} parent=1 // pred_region
      %51 = dma.done [#allocation5], 128
    $region29: #{tpu_custom_call.1} parent=1 // pred_fallthru
      _
    %v53 = vld [vmem:[#allocation6] sm:$0xff]
    %v54 = vld [vmem:[%s3] sm:$0xff]
    %v55 = vld [vmem:[#allocation2] sm:$0xff]
    %v56 = vmul.f32 %v53, %v53
    %vm57 = vcmask 261120
    %v58 = vsel %vm57, %v56, 0.0
    %59 = vadd.xlane.f32.xlu0 %v58
    %v60 = vpop.xlane.xlu0 %59
    %v61 = vmul.f32 %v54, %v54
    %v62 = vsel %vm57, %v61, 0.0
    %63 = vadd.xlane.f32.xlu0 %v62
    %v64 = vpop.xlane.xlu0 %63
    %v65 = vmax.f32 %v60, 1e-24
    %v66 = vrsqrt.pop %v65
    %v67 = vmax.f32 %v64, 1e-24
    %v68 = vrsqrt.pop %v67
    %v69 = vpack.c.bf16 %v53, %v53
    %v70 = vmul.f32 %v54, %v68
    %v71 = vpack.c.bf16 %v70, %v70
    %v72 = vpack.c.bf16 %v55, %v55
    %v73 = vld [vmem:[#allocation4] sm:$0xff]
    %v74 = vpack.c.bf16 %v73, %v73
    %v76 = vsel %vm57, %v69, 0
    %v79 = vsel %vm57, %v71, 0
    %81 = vmatprep.subr.bf16.mxu0 0
    %82 = vmatpush1.bf16.xpose.msra.mxu0 %v79
    %83 = vmatprep.subr.bf16.mxu0 0
    %84 = vmatpush1.bf16.xpose.msra.mxu0 0
    %85 = vmatprep.subr.bf16.mxu0 0
    %86 = vmatpush1.bf16.xpose.msra.mxu0 0
    %87 = vmatprep.subr.bf16.mxu0 0
    %88 = vmatpush1.bf16.xpose.msra.mxu0 0
    %89 = vmatprep.subr.bf16.mxu0 0
    %90 = vmatpush1.bf16.xpose.msra.mxu0 0
    %91 = vmatprep.subr.bf16.mxu0 0
    %92 = vmatpush1.bf16.xpose.msra.mxu0 0
    %93 = vmatprep.subr.bf16.mxu0 0
    %94 = vmatpush1.bf16.xpose.msra.mxu0 0
    %95 = vmatprep.subr.bf16.mxu0 0
    %96 = vmatpush1.bf16.xpose.msra.mxu0 0
    %97 = vmatprep.subr.bf16.mxu0 0
    %98 = vmatpush1.bf16.xpose.msra.mxu0 0
    %99 = vmatprep.subr.bf16.mxu0 0
    %100 = vmatpush1.bf16.xpose.msra.mxu0 0
    %101 = vmatprep.subr.bf16.mxu0 0
    %102 = vmatpush1.bf16.xpose.msra.mxu0 0
    %103 = vmatprep.subr.bf16.mxu0 0
    %104 = vmatpush1.bf16.xpose.msra.mxu0 0
    %105 = vmatprep.subr.bf16.mxu0 0
    %106 = vmatpush1.bf16.xpose.msra.mxu0 0
    %107 = vmatprep.subr.bf16.mxu0 0
    %108 = vmatpush1.bf16.xpose.msra.mxu0 0
    %109 = vmatprep.subr.bf16.mxu0 0
    %110 = vmatpush1.bf16.xpose.msra.mxu0 0
    %111 = vmatprep.subr.bf16.mxu0 0
    %112 = vmatpush1.bf16.xpose.msra.mxu0 0
    %113 = vmatprep.mubr.bf16.mxu0 0
    %114 = vmatmul.mubr.bf16.gmra.mrb[0].mxu0 %v76
    %v115 = vpop.f32.mrb[0].mxu0
    %v116 = vadd.f32 0.0, %v115
    %v117 = vpop.f32.mrb[0].mxu0
    %v118 = vpop.f32.mrb[0].mxu0
    %v119 = vpop.f32.mrb[0].mxu0
    %120 = vdwg.mxu0
    %v122 = vsel %vm57, %v72, 0
    %v125 = vsel %vm57, %v74, 0
    %127 = vmatprep.subr.bf16.mxu0 0
    %128 = vmatpush1.bf16.xpose.msra.mxu0 %v125
    %129 = vmatprep.subr.bf16.mxu0 0
    %130 = vmatpush1.bf16.xpose.msra.mxu0 0
    %131 = vmatprep.subr.bf16.mxu0 0
    %132 = vmatpush1.bf16.xpose.msra.mxu0 0
    %133 = vmatprep.subr.bf16.mxu0 0
    %134 = vmatpush1.bf16.xpose.msra.mxu0 0
    %135 = vmatprep.subr.bf16.mxu0 0
    %136 = vmatpush1.bf16.xpose.msra.mxu0 0
    %137 = vmatprep.subr.bf16.mxu0 0
    %138 = vmatpush1.bf16.xpose.msra.mxu0 0
    %139 = vmatprep.subr.bf16.mxu0 0
    %140 = vmatpush1.bf16.xpose.msra.mxu0 0
    %141 = vmatprep.subr.bf16.mxu0 0
    %142 = vmatpush1.bf16.xpose.msra.mxu0 0
    %143 = vmatprep.subr.bf16.mxu0 0
    %144 = vmatpush1.bf16.xpose.msra.mxu0 0
    %145 = vmatprep.subr.bf16.mxu0 0
    %146 = vmatpush1.bf16.xpose.msra.mxu0 0
    %147 = vmatprep.subr.bf16.mxu0 0
    %148 = vmatpush1.bf16.xpose.msra.mxu0 0
    %149 = vmatprep.subr.bf16.mxu0 0
    %150 = vmatpush1.bf16.xpose.msra.mxu0 0
    %151 = vmatprep.subr.bf16.mxu0 0
    %152 = vmatpush1.bf16.xpose.msra.mxu0 0
    %153 = vmatprep.subr.bf16.mxu0 0
    %154 = vmatpush1.bf16.xpose.msra.mxu0 0
    %155 = vmatprep.subr.bf16.mxu0 0
    %156 = vmatpush1.bf16.xpose.msra.mxu0 0
    %157 = vmatprep.subr.bf16.mxu0 0
    %158 = vmatpush1.bf16.xpose.msra.mxu0 0
    %159 = vmatprep.mubr.bf16.mxu0 0
    %160 = vmatmul.mubr.bf16.gmra.mrb[0].mxu0 %v122
    %v161 = vpop.f32.mrb[0].mxu0
    %v162 = vadd.f32 0.0, %v161
    %v163 = vpop.f32.mrb[0].mxu0
    %v164 = vpop.f32.mrb[0].mxu0
    %v165 = vpop.f32.mrb[0].mxu0
    %166 = vdwg.mxu0
    %v167 = vmul.f32 %v116, %v66
    %v168 = vsub.f32 %v167, %v162
    %v169 = vmul.f32 %v168, 10.0
    %v170 = vmul.f32 %v55, %v55
    %v171 = vsel %vm57, %v170, 0.0
    %172 = vadd.xlane.f32.xlu0 %v171
    %v173 = vpop.xlane.xlu0 %172
    %v174 = vmul.f32 %v66, %v66
    %v175 = vmul.f32 %v60, %v174
    %v176 = vsub.f32 %v175, %v173
    %v177 = vmul.f32 %v176, 10.0
    %v178 = vmul.f32 %v169, %v169
    %vm179 = vcmask 64512
    %v180 = vsel %vm179, %v178, 0.0
    %181 = vadd.xlane.f32.xlu0 %v180
    %v182 = vpop.xlane.xlu0 %181
    %v183 = vmul.f32 %v177, %v177
    %v184 = vsub.f32 %v182, %v183
    %vm185 = vcmask 7168
    %186 = vst.msk [vmem:[%s4] sm:$0xff] %vm185, %v184
    // Predicated region
    $region30: #{tpu_custom_call.1} parent=1 // pred_check
      _
    $region31: #{tpu_custom_call.1} parent=1 // pred_check_branch
      %188 = sbr.rel (0) target = $region33
    $region32: #{tpu_custom_call.1} parent=1 // pred_region
      _
    $region33: #{tpu_custom_call.1} parent=1 // pred_fallthru
      _
    // Predicated region
    $region34: #{tpu_custom_call.1} parent=1 // pred_check
      _
    $region35: #{tpu_custom_call.1} parent=1 // pred_check_branch
      %190 = sbr.rel (0) target = $region37
    $region36: #{tpu_custom_call.1} parent=1 // pred_region
      _
    $region37: #{tpu_custom_call.1} parent=1 // pred_fallthru
      _
    %191 = vsyncpa [#allocation3], 1
    %192 = vsyncpa [#allocation5], 1

</llo_original>
